<compile_context>
chip_gen: v7x
topology: tpu7x:2x2x1
jax: 0.10.0
libtpu: 0.0.40
codegen_flags: <defaults>
</compile_context>

<pallas_src>
import functools
import math
import warnings

import jax
import jax.numpy as jnp
from jax import lax
from jax.experimental import pallas as pl
from jax.experimental.pallas import tpu as pltpu


# ----------------------------- helpers --------------------------------------

def _round_up(x, m):
    return ((x + m - 1) // m) * m


def _pick_group_block(g, max_group=8, min_blocks=2):
    # Largest power-of-two <= max_group that divides g while leaving at least
    # `min_blocks` group blocks (so v7x's 2 TensorCores both get work; on
    # v5e/v6e the extra blocks just cost ~0.35us each).
    for cand in (8, 4, 2):
        if cand <= max_group and g % cand == 0 and g // cand >= min_blocks:
            return cand
    return 1


def _seq_tile(n, max_tile, align):
    """(tile, padded_n) for a sequence axis: full-dim block when it fits
    (no HBM pad / un-pad slice pass), otherwise an `align`-aligned tile."""
    if n <= max_tile:
        return n, n
    t = max(align, (max_tile // align) * align)
    return t, _round_up(n, t)


def _compute_dtype(in_dtype, mxu_dtype):
    in_dtype = jnp.dtype(in_dtype)
    if mxu_dtype is None:
        return in_dtype
    mxu_dtype = jnp.dtype(mxu_dtype)
    # Only narrow (f32 -> bf16); never widen bf16/f16 inputs.
    return mxu_dtype if in_dtype.itemsize > mxu_dtype.itemsize else in_dtype


def _vmem_limit_bytes():
    # Generation-aware scoped-VMEM limit: 128 MiB physical on v5e/v6e,
    # 64 MiB per TensorCore on v7x.  Leave headroom for compiler scratch.
    cap = 64 * 1024 * 1024
    try:
        cap = int(getattr(pltpu.get_tpu_info(), "vmem_capacity_bytes", cap))
    except Exception:
        pass
    return min(cap * 3 // 4, 100 * 1024 * 1024)


# ----------------------------- kernels ---------------------------------------

def _scores_kernel(q_ref, k_ref, o_ref, *, cdt, scale):
    # q_ref: (gb, TI, D), k_ref: (gb, TJ, D) -> o_ref: (gb, TI, TJ).
    # Per-tile cast to the MXU dtype (VPU work hidden under DMA) and the
    # 1/sqrt(D) scale folded into the epilogue.
    q = q_ref[...].astype(cdt)
    k = k_ref[...].astype(cdt)
    acc = lax.dot_general(q, k, dimension_numbers=(((2,), (2,)), ((0,), (0,))),
                          preferred_element_type=jnp.float32)
    if scale is not None:
        acc = acc * scale
    o_ref[...] = acc.astype(o_ref.dtype)


def _mix_kernel(p_ref, v_ref, o_ref, *, cdt, transpose_out):
    # Full-J path (whole reduction in one step): p (gb,TI,J), v (gb,J,D).
    p = p_ref[...].astype(cdt)
    v = v_ref[...].astype(cdt)
    if transpose_out:
        # (gb, D, TI): lane-dense stores + full MXU columns when D < 128.
        acc = lax.dot_general(v, p, dimension_numbers=(((1,), (2,)), ((0,), (0,))),
                              preferred_element_type=jnp.float32)
    else:
        # (gb, TI, D)
        acc = lax.dot_general(p, v, dimension_numbers=(((2,), (1,)), ((0,), (0,))),
                              preferred_element_type=jnp.float32)
    o_ref[...] = acc.astype(o_ref.dtype)


def _mix_kernel_acc(p_ref, v_ref, o_ref, acc_ref, *, cdt, transpose_out):
    # Tiled-J fallback: j is the last ("arbitrary") grid axis, accumulated in
    # an f32 VMEM scratch; init / finalize gated with pl.when.
    j = pl.program_id(2)

    @pl.when(j == 0)
    def _():
        acc_ref[...] = jnp.zeros_like(acc_ref)

    p = p_ref[...].astype(cdt)
    v = v_ref[...].astype(cdt)
    if transpose_out:
        acc_ref[...] += lax.dot_general(
            v, p, dimension_numbers=(((1,), (2,)), ((0,), (0,))),
            preferred_element_type=jnp.float32)
    else:
        acc_ref[...] += lax.dot_general(
            p, v, dimension_numbers=(((2,), (1,)), ((0,), (0,))),
            preferred_element_type=jnp.float32)

    @pl.when(j == pl.num_programs(2) - 1)
    def _():
        o_ref[...] = acc_ref[...].astype(o_ref.dtype)


# ----------------------------- wrappers --------------------------------------

def attention_scores(q, k, *, scale=None, out_dtype=None, mxu_dtype=jnp.bfloat16,
                     max_ti=256, max_tj=512, max_group=8):
    """'bhid,bhjd->bhij' : q (B,H,I,D), k (B,H,J,D) -> (B,H,I,J).

    `scale` (python float) is folded into the kernel epilogue.  Pass
    `out_dtype=jnp.bfloat16` to halve the (B,H,I,J) writeback on the bf16 path.
    """
    B, H, I, D = q.shape
    J = k.shape[2]
    in_dtype = jnp.result_type(q.dtype, k.dtype)
    if out_dtype is None:
        out_dtype = in_dtype
    cdt = _compute_dtype(in_dtype, mxu_dtype)

    G = B * H
    qg = q.reshape(G, I, D)          # free reshape; dtype cast happens in-kernel
    kg = k.reshape(G, J, D)

    ti, i_pad = _seq_tile(I, max_ti, 8)
    tj, j_pad = _seq_tile(J, max_tj, 128)
    if i_pad != I:
        qg = jnp.pad(qg, ((0, 0), (0, i_pad - I), (0, 0)))
    if j_pad != J:
        kg = jnp.pad(kg, ((0, 0), (0, j_pad - J), (0, 0)))

    gb = _pick_group_block(G, max_group)
    vmem_limit = _vmem_limit_bytes()
    in_b = jnp.dtype(in_dtype).itemsize
    out_b = jnp.dtype(out_dtype).itemsize

    def est(g):  # double-buffered inputs/outputs + f32 epilogue temp
        return (2 * g * (ti + tj) * D * in_b
                + 2 * g * ti * tj * out_b
                + g * ti * tj * 4)

    while gb > 1 and est(gb) > vmem_limit:
        gb //= 2

    grid = (G // gb, i_pad // ti, j_pad // tj)
    cost = pl.CostEstimate(
        flops=2 * G * i_pad * j_pad * D, transcendentals=0,
        bytes_accessed=int(qg.size * qg.dtype.itemsize
                           + kg.size * kg.dtype.itemsize
                           + G * i_pad * j_pad * out_b))

    out = pl.pallas_call(
        functools.partial(_scores_kernel, cdt=cdt,
                          scale=None if scale is None else float(scale)),
        out_shape=jax.ShapeDtypeStruct((G, i_pad, j_pad), out_dtype),
        grid_spec=pltpu.PrefetchScalarGridSpec(
            num_scalar_prefetch=0,
            grid=grid,
            in_specs=[
                pl.BlockSpec((gb, ti, D), lambda g, i, j: (g, i, 0)),
                pl.BlockSpec((gb, tj, D), lambda g, i, j: (g, j, 0)),
            ],
            out_specs=pl.BlockSpec((gb, ti, tj), lambda g, i, j: (g, i, j)),
        ),
        compiler_params=pltpu.CompilerParams(
            dimension_semantics=("parallel", "parallel", "parallel"),
            vmem_limit_bytes=vmem_limit,
        ),
        cost_estimate=cost,
    )(qg, kg)

    if i_pad != I or j_pad != J:
        out = out[:, :I, :J]
    return out.reshape(B, H, I, J)


def attention_mix(p, v, *, out_dtype=None, mxu_dtype=jnp.bfloat16,
                  max_ti=256, max_tj=1024, max_group=8):
    """'bhij,bhjd->bhid' : p (B,H,I,J), v (B,H,J,D) -> (B,H,I,D)."""
    B, H, I, J = p.shape
    D = v.shape[3]
    in_dtype = jnp.result_type(p.dtype, v.dtype)
    if out_dtype is None:
        out_dtype = in_dtype
    cdt = _compute_dtype(in_dtype, mxu_dtype)

    G = B * H
    pg = p.reshape(G, I, J)
    vg = v.reshape(G, J, D)

    ti, i_pad = _seq_tile(I, max_ti, 8)
    tj, j_pad = _seq_tile(J, max_tj, 128)
    if i_pad != I or j_pad != J:
        pg = jnp.pad(pg, ((0, 0), (0, i_pad - I), (0, j_pad - J)))
    if j_pad != J:
        vg = jnp.pad(vg, ((0, 0), (0, j_pad - J), (0, 0)))

    # Lane-dense output: when D < 128 the natural (.., TI, D) store is a masked
    # vst; emitting the transposed (.., D, TI) block keeps stores 128-wide and
    # raises MXU column utilization.  Only taken when TI is a legal last dim.
    if D % 128 == 0:
        transpose_out = False
    elif ti == i_pad:
        transpose_out = ti > D
    else:
        transpose_out = (ti % 128 == 0)

    single_j = (tj == j_pad)   # whole reduction fits one VMEM block

    gb = _pick_group_block(G, max_group)
    vmem_limit = _vmem_limit_bytes()
    in_b = jnp.dtype(in_dtype).itemsize
    out_b = jnp.dtype(out_dtype).itemsize

    def est(g):
        return (2 * g * ti * tj * in_b        # p block (double-buffered)
                + 2 * g * tj * D * in_b       # v block
                + 2 * g * ti * D * out_b      # out block
                + g * ti * D * 4)             # f32 accumulator / epilogue temp

    while gb > 1 and est(gb) > vmem_limit:
        gb //= 2

    out_block = (gb, D, ti) if transpose_out else (gb, ti, D)
    out_array = (G, D, i_pad) if transpose_out else (G, i_pad, D)
    cost = pl.CostEstimate(
        flops=2 * G * i_pad * j_pad * D, transcendentals=0,
        bytes_accessed=int(pg.size * pg.dtype.itemsize
                           + vg.size * vg.dtype.itemsize
                           + G * i_pad * D * out_b))

    if single_j:
        out = pl.pallas_call(
            functools.partial(_mix_kernel, cdt=cdt, transpose_out=transpose_out),
            out_shape=jax.ShapeDtypeStruct(out_array, out_dtype),
            grid_spec=pltpu.PrefetchScalarGridSpec(
                num_scalar_prefetch=0,
                grid=(G // gb, i_pad // ti),
                in_specs=[
                    pl.BlockSpec((gb, ti, tj), lambda g, i: (g, i, 0)),
                    pl.BlockSpec((gb, tj, D), lambda g, i: (g, 0, 0)),
                ],
                out_specs=pl.BlockSpec(
                    out_block,
                    (lambda g, i: (g, 0, i)) if transpose_out
                    else (lambda g, i: (g, i, 0))),
            ),
            compiler_params=pltpu.CompilerParams(
                dimension_semantics=("parallel", "parallel"),
                vmem_limit_bytes=vmem_limit,
            ),
            cost_estimate=cost,
        )(pg, vg)
    else:
        out = pl.pallas_call(
            functools.partial(_mix_kernel_acc, cdt=cdt, transpose_out=transpose_out),
            out_shape=jax.ShapeDtypeStruct(out_array, out_dtype),
            grid_spec=pltpu.PrefetchScalarGridSpec(
                num_scalar_prefetch=0,
                grid=(G // gb, i_pad // ti, j_pad // tj),   # reduction (j) last
                in_specs=[
                    pl.BlockSpec((gb, ti, tj), lambda g, i, j: (g, i, j)),
                    pl.BlockSpec((gb, tj, D), lambda g, i, j: (g, j, 0)),
                ],
                out_specs=pl.BlockSpec(
                    out_block,
                    (lambda g, i, j: (g, 0, i)) if transpose_out
                    else (lambda g, i, j: (g, i, 0))),
                scratch_shapes=[pltpu.VMEM(out_block, jnp.float32)],
            ),
            compiler_params=pltpu.CompilerParams(
                dimension_semantics=("parallel", "parallel", "arbitrary"),
                vmem_limit_bytes=vmem_limit,
            ),
            cost_estimate=cost,
        )(pg, vg)

    if transpose_out:
        if i_pad != I:
            out = out[:, :, :I]
        # TODO(synk): this relayout back to (B,H,I,D) is one extra XLA pass over
        # the (small, G*I*D) output; fold it into the downstream consumer when
        # the surrounding model can accept a (B, I, H*D) layout.
        out = jnp.swapaxes(out, 1, 2)
    elif i_pad != I:
        out = out[:, :I, :]
    return out.reshape(B, H, I, D)


# ------------------------- einsum "module" -----------------------------------

class EinsumPallas:
    """Pallas equivalent of the PyTorch `einsum` module (forward pass only)."""

    def __init__(self, equation):
        self.equation = equation.replace(" ", "")

    def __call__(self, *operands, **kwargs):
        if self.equation == "bhid,bhjd->bhij":
            return attention_scores(*operands, **kwargs)
        if self.equation == "bhij,bhjd->bhid":
            return attention_mix(*operands, **kwargs)
        # TODO(synk): general einsum equations have no Pallas kernel here.
        warnings.warn(
            f"EinsumPallas: equation '{self.equation}' has no Pallas kernel; "
            "falling back to jnp.einsum (XLA).")
        return jnp.einsum(self.equation, *operands)


# ------------------------- demo / self-test -----------------------------------

if __name__ == "__main__":
    keys = jax.random.split(jax.random.PRNGKey(0), 10)
    hp = jax.lax.Precision.HIGHEST

    # --- module-contract shapes (small) ---
    B, H, S, D = 2, 4, 8, 32
    q = jax.random.normal(keys[0], (B, H, S, D), dtype=jnp.float32)
    k = jax.random.normal(keys[1], (B, H, S, D), dtype=jnp.float32)
    v = jax.random.normal(keys[2], (B, H, S, D), dtype=jnp.float32)

    matmul1 = EinsumPallas("bhid,bhjd->bhij")  # Q·K^T
    matmul2 = EinsumPallas("bhij,bhjd->bhid")  # attn·V
    scale = 1.0 / math.sqrt(D)

    # ---- exact-f32 path (mxu_dtype=None), scale folded into the epilogue ----
    scores_f32 = matmul1(q, k, mxu_dtype=None, scale=scale)
    attn_f32 = jax.nn.softmax(scores_f32, axis=-1)
    out_f32 = matmul2(attn_f32, v, mxu_dtype=None)
    jax.block_until_ready(out_f32)

    scores_ref = jnp.einsum("bhid,bhjd->bhij", q, k, precision=hp) * scale
    out_ref = jnp.einsum("bhij,bhjd->bhid", attn_f32, v, precision=hp)
    assert scores_f32.shape == (B, H, S, S)
    assert out_f32.shape == (B, H, S, D)
    assert jnp.allclose(scores_f32, scores_ref, atol=2e-3, rtol=2e-3)
    assert jnp.allclose(out_f32, out_ref, atol=2e-3, rtol=2e-3)

    # ---- default fast path: bf16 MXU operands (in-kernel cast), f32 acc,
    #      bf16 scores output ----
    scores_bf = matmul1(q, k, scale=scale, out_dtype=jnp.bfloat16)
    attn_bf = jax.nn.softmax(scores_bf.astype(jnp.float32), axis=-1)
    out_bf = matmul2(attn_bf, v)
    jax.block_until_ready(out_bf)

    def ein_bf16(eq, a, b):
        return jnp.einsum(eq, a.astype(jnp.bfloat16), b.astype(jnp.bfloat16),
                          preferred_element_type=jnp.float32)

    scores_bref = (ein_bf16("bhid,bhjd->bhij", q, k) * scale).astype(jnp.bfloat16)
    out_bref = ein_bf16("bhij,bhjd->bhid", attn_bf, v)
    assert scores_bf.dtype == jnp.bfloat16
    assert jnp.allclose(scores_bf.astype(jnp.float32),
                        scores_bref.astype(jnp.float32), atol=2e-2, rtol=2e-2)
    assert jnp.allclose(out_bf, out_bref, atol=2e-2, rtol=2e-2)

    # ---- lane-dense (transposed-store) mix path: D < 128, I a 128-multiple ----
    B2, H2, I2, J2, D2 = 1, 2, 128, 64, 32
    p2 = jax.random.normal(keys[3], (B2, H2, I2, J2), dtype=jnp.float32)
    v2 = jax.random.normal(keys[4], (B2, H2, J2, D2), dtype=jnp.float32)
    out2 = matmul2(p2, v2, mxu_dtype=None)
    ref2 = jnp.einsum("bhij,bhjd->bhid", p2, v2, precision=hp)
    assert out2.shape == (B2, H2, I2, D2)
    assert jnp.allclose(out2, ref2, atol=2e-3, rtol=2e-3)

    # ---- padded / tiled fallback path (ragged I, tiled-J accumulator) ----
    B3, H3, I3, J3, D3 = 1, 2, 200, 256, 32
    q3 = jax.random.normal(keys[5], (B3, H3, I3, D3), dtype=jnp.float32)
    k3 = jax.random.normal(keys[6], (B3, H3, J3, D3), dtype=jnp.float32)
    v3 = jax.random.normal(keys[7], (B3, H3, J3, D3), dtype=jnp.float32)

    scores3 = matmul1(q3, k3, mxu_dtype=None, max_ti=128, max_tj=128)
    ref_s3 = jnp.einsum("bhid,bhjd->bhij", q3, k3, precision=hp)
    assert scores3.shape == (B3, H3, I3, J3)
    assert jnp.allclose(scores3, ref_s3, atol=2e-3, rtol=2e-3)

    p3 = jax.nn.softmax(ref_s3 / math.sqrt(D3), axis=-1)
    out3 = matmul2(p3, v3, mxu_dtype=None, max_ti=128, max_tj=128)
    ref_o3 = jnp.einsum("bhij,bhjd->bhid", p3, v3, precision=hp)
    assert out3.shape == (B3, H3, I3, D3)
    assert jnp.allclose(out3, ref_o3, atol=2e-3, rtol=2e-3)

    jax.block_until_ready((scores3, out3))
    print("KERNEL_OK")
</pallas_src>

<mosaic_0001>
module attributes {stable_mosaic.version = 11 : i64} {
  func.func @_scores_kernel(%arg0: i32, %arg1: i32, %arg2: i32, %arg3: memref<4x8x32xf32, #tpu.memory_space<vmem>>, %arg4: memref<4x8x32xf32, #tpu.memory_space<vmem>>, %arg5: memref<4x8x8xf32, #tpu.memory_space<vmem>>) attributes {dimension_semantics = [#tpu.dimension_semantics<parallel>, #tpu.dimension_semantics<parallel>, #tpu.dimension_semantics<parallel>], iteration_bounds = array<i64: 2, 1, 1>, scalar_prefetch = 0 : i64, scratch_operands = 0 : i64, tpu.core_type = #tpu.core_type<tc>, window_params = [{transform_indices = @transform_0, window_bounds = array<i64: 4, 8, 32>}, {transform_indices = @transform_1, window_bounds = array<i64: 4, 8, 32>}, {transform_indices = @transform_2, window_bounds = array<i64: 4, 8, 8>}]} {
    %c0 = arith.constant 0 : index
    %c0_0 = arith.constant 0 : index
    %c0_1 = arith.constant 0 : index
    %0 = vector.load %arg3[%c0, %c0_0, %c0_1] : memref<4x8x32xf32, #tpu.memory_space<vmem>>, vector<4x8x32xf32>
    %c0_2 = arith.constant 0 : index
    %c0_3 = arith.constant 0 : index
    %c0_4 = arith.constant 0 : index
    %1 = vector.load %arg4[%c0_2, %c0_3, %c0_4] : memref<4x8x32xf32, #tpu.memory_space<vmem>>, vector<4x8x32xf32>
    %cst = arith.constant dense<0.000000e+00> : vector<4x8x8xf32>
    %2 = tpu.matmul %0, %1, %cst {dimension_numbers = #tpu.dot_dimension_numbers<[2], [2], [1], [1], [0, 0, 0, 1, 1, 1], [0], [0]>} : vector<4x8x32xf32>, vector<4x8x32xf32>, vector<4x8x8xf32> -> vector<4x8x8xf32>
    %cst_5 = arith.constant 0.176776692 : f32
    %3 = vector.broadcast %cst_5 : f32 to vector<4x8x8xf32>
    %4 = arith.mulf %2, %3 : vector<4x8x8xf32>
    %c0_6 = arith.constant 0 : index
    %c0_7 = arith.constant 0 : index
    %c0_8 = arith.constant 0 : index
    %5 = vector.load %arg5[%c0_6, %c0_7, %c0_8] : memref<4x8x8xf32, #tpu.memory_space<vmem>>, vector<4x8x8xf32>
    tpu.vector_store %arg5[%c0_6, %c0_7, %c0_8], %4 {strides = array<i32>} : memref<4x8x8xf32, #tpu.memory_space<vmem>>, vector<4x8x8xf32>,
    return
  }
  func.func @transform_0(%arg0: i32, %arg1: i32, %arg2: i32) -> (i32, i32, i32) {
    %c0_i32 = arith.constant 0 : i32
    %c0_i32_0 = arith.constant 0 : i32
    return %arg0, %arg1, %c0_i32 : i32, i32, i32
  }
  func.func @transform_1(%arg0: i32, %arg1: i32, %arg2: i32) -> (i32, i32, i32) {
    %c0_i32 = arith.constant 0 : i32
    %c0_i32_0 = arith.constant 0 : i32
    return %arg0, %arg2, %c0_i32 : i32, i32, i32
  }
  func.func @transform_2(%arg0: i32, %arg1: i32, %arg2: i32) -> (i32, i32, i32) {
    %c0_i32 = arith.constant 0 : i32
    return %arg0, %arg1, %arg2 : i32, i32, i32
  }
}

</mosaic_0001>

<llo_original>
// kernel: tpu_custom_call.1
$region0: #{tpu_custom_call.1}
  #allocation0 [shape = 'u32[]', space=smem, size = 0x4, offset = 0x4, fixed_abs, tag = 'smem constant byte address 0x4 - core index']
  #allocation1 [shape = 'u32[144,128]{1,0:T(1,128)}', space=vmem, size = 0x12000, scoped, tag = 'internal scratch']
  %s0 = inlined_call_operand.hbm [shape: f32[8,8,32], index: 0, kind: input, shape index: {}]
  %s1 = inlined_call_operand.hbm [shape: f32[8,8,32], index: 1, kind: input, shape index: {}]
  %s2 = inlined_call_operand.hbm [shape: f32[8,8,8], index: 2, kind: output, shape index: {}]
  %s3 = sld [smem:[#allocation0]]
  $region49: #{tpu_custom_call.1} parent=0
    _
  %s5 = ssub.s32 1, %s3
  %s6 = scalar_select 0, %s5, %s3
  $region1: #{tpu_custom_call.1} parent=0
    #allocation2 [shape = 'u8[32768]{0}', space=vmem, size = 0x8000, scoped, tag = 'input window, operand 0']
    #allocation3 [shape = 's32[2]{0}', space=sflag, size = 0x8, scoped, tag = 'scoped memory for tpu_custom_call.1']
    #allocation4 [shape = 's32[2]{0}', space=sflag, size = 0x8, scoped, tag = 'scoped memory for tpu_custom_call.1']
    #allocation5 [shape = 'u8[32768]{0}', space=vmem, size = 0x8000, scoped, tag = 'input window, operand 1']
    #allocation6 [shape = 's32[2]{0}', space=sflag, size = 0x8, scoped, tag = 'scoped memory for tpu_custom_call.1']
    #allocation7 [shape = 'u8[32768]{0}', space=vmem, size = 0x8000, scoped, tag = 'output window, operand 0']
    %7 = vsyncpa [#allocation3], 0
    %s8 = scalar_lea.sflag [#allocation3], 1
    %9 = vsyncpa %s8, 0
    %10 = vsyncpa [#allocation6], 0
    %s11 = scalar_lea.sflag [#allocation6], 1
    %12 = vsyncpa %s11, 0
    %13 = vsyncpa [#allocation4], 0
    %s14 = scalar_lea.sflag [#allocation4], 1
    %15 = vsyncpa %s14, 0
    loop: start=0, step=1, limit=4
    $region2: #{tpu_custom_call.1} parent=1 // loop_pre_header
      _
    $region3: #{tpu_custom_call.1} parent=1 // loop_header
      %s17 = sphi 0, %s21
      %p18 = scmp.ge.s32.totalorder %s17, 4
      %s24 = sphi 0, %s43
      %s25 = sphi 0, %s39
      %s26 = sphi 0, %s35
      %s27 = sphi 0, %s24
      %s28 = sphi 0, %s25
      %s29 = sphi 0, %s26
      %s30 = sphi 0, %s27
      %s31 = sphi 0, %s28
      %s32 = sphi 0, %s29
      %s48 = sphi 0, %s50
      %s51 = sphi 0, %s48
      %s52 = sphi 0, %s51
      %s68 = sphi 0, %s52
      %s76 = sphi 0, %s78
      %s79 = sphi 0, %s76
      %s80 = sphi 0, %s79
      %s96 = sphi 0, %s80
      %s106 = sphi 0, %s108
      %s109 = sphi 0, %s106
      %s110 = sphi 0, %s109
      %s126 = sphi 0, %s110
    $region4: #{tpu_custom_call.1} parent=1 // loop_header_branch
      %20 = sbr.rel (%p18) target = $region8
    $region5: #{tpu_custom_call.1} parent=1 // loop_body
      %s22 = ssub.s32 %s17, 1
      %s23 = ssub.s32 %s17, 2
      %s33 = sadd.s32 1, %s26
      %p34 = scmp.ge.s32.totalorder %s33, 1
      %s35 = scalar_select %p34, 0, %s33
      %s36 = sadd.s32 1, %s25
      %s37 = scalar_select %p34, %s36, %s25
      %p38 = scmp.ge.s32.totalorder %s37, 1
      %s39 = scalar_select %p38, 0, %s37
      %s40 = sadd.s32 1, %s24
      %s41 = scalar_select %p38, %s40, %s24
      %p42 = scmp.ge.s32.totalorder %s41, 2
      %s43 = scalar_select %p42, 0, %s41
      %s44 = ssub.s32 %s24, %s43
      %s45 = ssub.s32 %s25, %s39
      %s46 = sor.u32 %s44, %s45
      %p47 = scmp.eq.s32.totalorder %s46, 0
      %s49 = sadd.s32 %s48, 1
      %s50 = scalar_select %p47, %s48, %s49
      %p53 = pneg %p47
      %p54 = scmp.eq.s32.totalorder %s17, 1
      %p55 = por %p53, %p54
      %p56 = scmp.ne.s32.totalorder %s48, %s51
      %p57 = scmp.eq.s32.totalorder %s17, 0
      %p58 = por %p56, %p57
      %p59 = scmp.ne.s32.totalorder %s48, %s51
      %p60 = scmp.eq.s32.totalorder %s22, 1
      %p61 = por %p59, %p60
      %p62 = scmp.ne.s32.totalorder %s51, %s52
      %p63 = scmp.eq.s32.totalorder %s22, 0
      %p64 = por %p62, %p63
      %p65 = scmp.ne.s32.totalorder %s51, %s52
      %p66 = scmp.eq.s32.totalorder %s23, 1
      %p67 = por %p65, %p66
      %p69 = scmp.ne.s32.totalorder %s52, %s68
      %p70 = scmp.eq.s32.totalorder %s23, 0
      %p71 = por %p69, %p70
      %s72 = ssub.s32 %s24, %s43
      %s73 = ssub.s32 %s26, %s35
      %s74 = sor.u32 %s72, %s73
      %p75 = scmp.eq.s32.totalorder %s74, 0
      %s77 = sadd.s32 %s76, 1
      %s78 = scalar_select %p75, %s76, %s77
      %p81 = pneg %p75
      %p82 = scmp.eq.s32.totalorder %s17, 1
      %p83 = por %p81, %p82
      %p84 = scmp.ne.s32.totalorder %s76, %s79
      %p85 = scmp.eq.s32.totalorder %s17, 0
      %p86 = por %p84, %p85
      %p87 = scmp.ne.s32.totalorder %s76, %s79
      %p88 = scmp.eq.s32.totalorder %s22, 1
      %p89 = por %p87, %p88
      %p90 = scmp.ne.s32.totalorder %s79, %s80
      %p91 = scmp.eq.s32.totalorder %s22, 0
      %p92 = por %p90, %p91
      %p93 = scmp.ne.s32.totalorder %s79, %s80
      %p94 = scmp.eq.s32.totalorder %s23, 1
      %p95 = por %p93, %p94
      %p97 = scmp.ne.s32.totalorder %s80, %s96
      %p98 = scmp.eq.s32.totalorder %s23, 0
      %p99 = por %p97, %p98
      %s100 = ssub.s32 %s24, %s43
      %s101 = ssub.s32 %s25, %s39
      %s102 = sor.u32 %s100, %s101
      %s103 = ssub.s32 %s26, %s35
      %s104 = sor.u32 %s102, %s103
      %p105 = scmp.eq.s32.totalorder %s104, 0
      %s107 = sadd.s32 %s106, 1
      %s108 = scalar_select %p105, %s106, %s107
      %p111 = pneg %p105
      %p112 = scmp.eq.s32.totalorder %s17, 1
      %p113 = por %p111, %p112
      %p114 = scmp.ne.s32.totalorder %s106, %s109
      %p115 = scmp.eq.s32.totalorder %s17, 0
      %p116 = por %p114, %p115
      %p117 = scmp.ne.s32.totalorder %s106, %s109
      %p118 = scmp.eq.s32.totalorder %s22, 1
      %p119 = por %p117, %p118
      %p120 = scmp.ne.s32.totalorder %s109, %s110
      %p121 = scmp.eq.s32.totalorder %s22, 0
      %p122 = por %p120, %p121
      %p123 = scmp.ne.s32.totalorder %s109, %s110
      %p124 = scmp.eq.s32.totalorder %s23, 1
      %p125 = por %p123, %p124
      %p127 = scmp.ne.s32.totalorder %s110, %s126
      %p128 = scmp.eq.s32.totalorder %s23, 0
      %p129 = por %p127, %p128
      %p130 = scmp.le.s32.totalorder 1, %s17
      %p131 = scmp.lt.s32.totalorder %s17, 3
      %p132 = pnand %p130, %p131
      %p133 = pneg %p132
      // Predicated region
      $region9: #{tpu_custom_call.1} parent=5 // pred_check
        _
      $region10: #{tpu_custom_call.1} parent=5 // pred_check_branch
        %135 = sbr.rel (%p132) target = $region12
      $region11: #{tpu_custom_call.1} parent=5 // pred_region
        %s136 = ssub.s32 %s17, 1
      $region12: #{tpu_custom_call.1} parent=5 // pred_fallthru
        _
      %p137 = scmp.lt.s32.totalorder %s17, 2
      // Predicated region
      $region13: #{tpu_custom_call.1} parent=5 // pred_check
        %p138 = pneg %p137
      $region14: #{tpu_custom_call.1} parent=5 // pred_check_branch
        %140 = sbr.rel (%p138) target = $region16
      $region15: #{tpu_custom_call.1} parent=5 // pred_region
        // Predicated region
        $region17: #{tpu_custom_call.1} parent=15 // pred_check
          %p141 = pneg %p58
        $region18: #{tpu_custom_call.1} parent=15 // pred_check_branch
          %143 = sbr.rel (%p141) target = $region20
        $region19: #{tpu_custom_call.1} parent=15 // pred_region
          %s144 = sand.u32 %s48, 1
          %s145 = scalar_lea.sflag [#allocation3], %s144
          %s146 = sand.u32 %s48, 1
          %s147 = smul.addr %s146, 32
          %s148 = scalar_lea.vmem [#allocation2], %s147
          %s149 = smul.u32 4, %s24
          %s151 = ssub.s32 512, 512
          %152 = vsyncadd %s145, %s151
          %s153 = sadd.s32 %s25, %s149
          %s154 = smul.addr %s153, 128
          %s155 = scalar_lea.hbm %s0, %s154
          %s156 = sshll.u32 %s148, 4
          %s157 = int_to_ptr.vmem [resolvable:$true] %s156
          %162 = dma.hbm_to_vmem [thread:$0]  %s155, 512, %s157, %s145, 128, 128, 8
        $region20: #{tpu_custom_call.1} parent=15 // pred_fallthru
          _
        // Predicated region
        $region21: #{tpu_custom_call.1} parent=15 // pred_check
          %p163 = pneg %p86
        $region22: #{tpu_custom_call.1} parent=15 // pred_check_branch
          %165 = sbr.rel (%p163) target = $region24
        $region23: #{tpu_custom_call.1} parent=15 // pred_region
          %s166 = sand.u32 %s76, 1
          %s167 = scalar_lea.sflag [#allocation6], %s166
          %s168 = sand.u32 %s76, 1
          %s169 = smul.addr %s168, 32
          %s170 = scalar_lea.vmem [#allocation5], %s169
          %s171 = smul.u32 4, %s24
          %s173 = ssub.s32 512, 512
          %174 = vsyncadd %s167, %s173
          %s175 = sadd.s32 %s26, %s171
          %s176 = smul.addr %s175, 128
          %s177 = scalar_lea.hbm %s1, %s176
          %s178 = sshll.u32 %s170, 4
          %s179 = int_to_ptr.vmem [resolvable:$true] %s178
          %184 = dma.hbm_to_vmem [thread:$0]  %s177, 512, %s179, %s167, 128, 128, 8
        $region24: #{tpu_custom_call.1} parent=15 // pred_fallthru
          _
      $region16: #{tpu_custom_call.1} parent=5 // pred_fallthru
        _
      %p185 = scmp.le.s32.totalorder 1, %s17
      %p186 = scmp.lt.s32.totalorder %s17, 3
      %p187 = pnand %p185, %p186
      %p188 = pneg %p187
      // Predicated region
      $region25: #{tpu_custom_call.1} parent=5 // pred_check
        _
      $region26: #{tpu_custom_call.1} parent=5 // pred_check_branch
        %190 = sbr.rel (%p187) target = $region28
      $region27: #{tpu_custom_call.1} parent=5 // pred_region
        %s191 = ssub.s32 %s17, 1
        %s192 = sand.u32 %s51, 1
        %s193 = scalar_lea.sflag [#allocation3], %s192
        %s194 = sand.u32 %s51, 1
        %s195 = smul.addr %s194, 32
        %s196 = scalar_lea.vmem [#allocation2], %s195
        // Predicated region
        $region29: #{tpu_custom_call.1} parent=27 // pred_check
          %p197 = pneg %p64
        $region30: #{tpu_custom_call.1} parent=27 // pred_check_branch
          %199 = sbr.rel (%p197) target = $region32
        $region31: #{tpu_custom_call.1} parent=27 // pred_region
          %200 = dma.done %s193, 512
        $region32: #{tpu_custom_call.1} parent=27 // pred_fallthru
          _
        %s201 = sand.u32 %s79, 1
        %s202 = scalar_lea.sflag [#allocation6], %s201
        %s203 = sand.u32 %s79, 1
        %s204 = smul.addr %s203, 32
        %s205 = scalar_lea.vmem [#allocation5], %s204
        // Predicated region
        $region33: #{tpu_custom_call.1} parent=27 // pred_check
          %p206 = pneg %p92
        $region34: #{tpu_custom_call.1} parent=27 // pred_check_branch
          %208 = sbr.rel (%p206) target = $region36
        $region35: #{tpu_custom_call.1} parent=27 // pred_region
          %209 = dma.done %s202, 512
        $region36: #{tpu_custom_call.1} parent=27 // pred_fallthru
          _
        %s210 = sand.u32 %s51, 1
        %s211 = scalar_lea.sflag [#allocation3], %s210
        %s212 = sand.u32 %s51, 1
        %s213 = smul.addr %s212, 32
        %s214 = scalar_lea.vmem [#allocation2], %s213
        %p215 = pneg %p64
        %p216 = pneg %p61
        %s217 = sand.u32 %s79, 1
        %s218 = scalar_lea.sflag [#allocation6], %s217
        %s219 = sand.u32 %s79, 1
        %s220 = smul.addr %s219, 32
        %s221 = scalar_lea.vmem [#allocation5], %s220
        %p222 = pneg %p92
        %p223 = pneg %p89
        %p224 = pneg %p122
        %p225 = pneg %p119
        %s226 = sand.u32 %s109, 1
        %s227 = scalar_lea.sflag [#allocation4], %s226
        %s228 = sand.u32 %s109, 1
        %s229 = smul.addr %s228, 32
        %s230 = scalar_lea.vmem [#allocation7], %s229
        %s231 = smul.u32 4, %s27
        %s232 = smul.u32 4, %s27
        %s233 = smul.u32 4, %s27
        %v234 = vld [vmem:[%s196] sm:$0xff]
        %v235 = vld [vmem:[%s196 + $0x8] sm:$0xff]
        %v236 = vld [vmem:[%s196 + $0x10] sm:$0xff]
        %v237 = vld [vmem:[%s196 + $0x18] sm:$0xff]
        %v238 = vld [vmem:[%s205] sm:$0xff]
        %v239 = vld [vmem:[%s205 + $0x8] sm:$0xff]
        %v240 = vld [vmem:[%s205 + $0x10] sm:$0xff]
        %v241 = vld [vmem:[%s205 + $0x18] sm:$0xff]
        %vm242 = vcmask 261120
        %v244 = vsel %vm242, %v234, 0
        %v247 = vsel %vm242, %v238, 0
        %249 = vmatprep.subr.mxu0 0.0
        %250 = vmatpush1.xpose.msra.mxu0 %v247
        %251 = vmatprep.subr.mxu0 0.0
        %252 = vmatpush1.xpose.msra.mxu0 0.0
        %253 = vmatprep.subr.mxu0 0.0
        %254 = vmatpush1.xpose.msra.mxu0 0.0
        %255 = vmatprep.subr.mxu0 0.0
        %256 = vmatpush1.xpose.msra.mxu0 0.0
        %257 = vmatprep.subr.mxu0 0.0
        %258 = vmatpush1.xpose.msra.mxu0 0.0
        %259 = vmatprep.subr.mxu0 0.0
        %260 = vmatpush1.xpose.msra.mxu0 0.0
        %261 = vmatprep.subr.mxu0 0.0
        %262 = vmatpush1.xpose.msra.mxu0 0.0
        %263 = vmatprep.subr.mxu0 0.0
        %264 = vmatpush1.xpose.msra.mxu0 0.0
        %265 = vmatprep.subr.mxu0 0.0
        %266 = vmatpush1.xpose.msra.mxu0 0.0
        %267 = vmatprep.subr.mxu0 0.0
        %268 = vmatpush1.xpose.msra.mxu0 0.0
        %269 = vmatprep.subr.mxu0 0.0
        %270 = vmatpush1.xpose.msra.mxu0 0.0
        %271 = vmatprep.subr.mxu0 0.0
        %272 = vmatpush1.xpose.msra.mxu0 0.0
        %273 = vmatprep.subr.mxu0 0.0
        %274 = vmatpush1.xpose.msra.mxu0 0.0
        %275 = vmatprep.subr.mxu0 0.0
        %276 = vmatpush1.xpose.msra.mxu0 0.0
        %277 = vmatprep.subr.mxu0 0.0
        %278 = vmatpush1.xpose.msra.mxu0 0.0
        %279 = vmatprep.subr.mxu0 0.0
        %280 = vmatpush1.xpose.msra.mxu0 0.0
        %281 = vmatprep.subr.mxu0 0.0
        %282 = vmatpush1.xpose.msra.mxu0 0.0
        %283 = vmatprep.subr.mxu0 0.0
        %284 = vmatpush1.xpose.msra.mxu0 0.0
        %285 = vmatprep.subr.mxu0 0.0
        %286 = vmatpush1.xpose.msra.mxu0 0.0
        %287 = vmatprep.subr.mxu0 0.0
        %288 = vmatpush1.xpose.msra.mxu0 0.0
        %289 = vmatprep.subr.mxu0 0.0
        %290 = vmatpush1.xpose.msra.mxu0 0.0
        %291 = vmatprep.subr.mxu0 0.0
        %292 = vmatpush1.xpose.msra.mxu0 0.0
        %293 = vmatprep.subr.mxu0 0.0
        %294 = vmatpush1.xpose.msra.mxu0 0.0
        %295 = vmatprep.subr.mxu0 0.0
        %296 = vmatpush1.xpose.msra.mxu0 0.0
        %297 = vmatprep.subr.mxu0 0.0
        %298 = vmatpush1.xpose.msra.mxu0 0.0
        %299 = vmatprep.subr.mxu0 0.0
        %300 = vmatpush1.xpose.msra.mxu0 0.0
        %301 = vmatprep.subr.mxu0 0.0
        %302 = vmatpush1.xpose.msra.mxu0 0.0
        %303 = vmatprep.subr.mxu0 0.0
        %304 = vmatpush1.xpose.msra.mxu0 0.0
        %305 = vmatprep.subr.mxu0 0.0
        %306 = vmatpush1.xpose.msra.mxu0 0.0
        %307 = vmatprep.subr.mxu0 0.0
        %308 = vmatpush1.xpose.msra.mxu0 0.0
        %309 = vmatprep.subr.mxu0 0.0
        %310 = vmatpush1.xpose.msra.mxu0 0.0
        %311 = vmatprep.subr.mxu0 0.0
        %312 = vmatpush1.xpose.msra.mxu0 0.0
        %313 = vmatprep.mubr.f32.mxu0 0.0
        %314 = vmatmul.mubr.f32.gmra.mrb[0].mxu0 %v244
        %v315 = vpop.f32.mrb[0].mxu0
        %v316 = vadd.f32 0.0, %v315
        %v317 = vpop.f32.mrb[0].mxu0
        %318 = vdwg.mxu0
        %v320 = vsel %vm242, %v235, 0
        %v323 = vsel %vm242, %v239, 0
        %325 = vmatprep.subr.mxu0 0.0
        %326 = vmatpush1.xpose.msra.mxu0 %v323
        %327 = vmatprep.subr.mxu0 0.0
        %328 = vmatpush1.xpose.msra.mxu0 0.0
        %329 = vmatprep.subr.mxu0 0.0
        %330 = vmatpush1.xpose.msra.mxu0 0.0
        %331 = vmatprep.subr.mxu0 0.0
        %332 = vmatpush1.xpose.msra.mxu0 0.0
        %333 = vmatprep.subr.mxu0 0.0
        %334 = vmatpush1.xpose.msra.mxu0 0.0
        %335 = vmatprep.subr.mxu0 0.0
        %336 = vmatpush1.xpose.msra.mxu0 0.0
        %337 = vmatprep.subr.mxu0 0.0
        %338 = vmatpush1.xpose.msra.mxu0 0.0
        %339 = vmatprep.subr.mxu0 0.0
        %340 = vmatpush1.xpose.msra.mxu0 0.0
        %341 = vmatprep.subr.mxu0 0.0
        %342 = vmatpush1.xpose.msra.mxu0 0.0
        %343 = vmatprep.subr.mxu0 0.0
        %344 = vmatpush1.xpose.msra.mxu0 0.0
        %345 = vmatprep.subr.mxu0 0.0
        %346 = vmatpush1.xpose.msra.mxu0 0.0
        %347 = vmatprep.subr.mxu0 0.0
        %348 = vmatpush1.xpose.msra.mxu0 0.0
        %349 = vmatprep.subr.mxu0 0.0
        %350 = vmatpush1.xpose.msra.mxu0 0.0
        %351 = vmatprep.subr.mxu0 0.0
        %352 = vmatpush1.xpose.msra.mxu0 0.0
        %353 = vmatprep.subr.mxu0 0.0
        %354 = vmatpush1.xpose.msra.mxu0 0.0
        %355 = vmatprep.subr.mxu0 0.0
        %356 = vmatpush1.xpose.msra.mxu0 0.0
        %357 = vmatprep.subr.mxu0 0.0
        %358 = vmatpush1.xpose.msra.mxu0 0.0
        %359 = vmatprep.subr.mxu0 0.0
        %360 = vmatpush1.xpose.msra.mxu0 0.0
        %361 = vmatprep.subr.mxu0 0.0
        %362 = vmatpush1.xpose.msra.mxu0 0.0
        %363 = vmatprep.subr.mxu0 0.0
        %364 = vmatpush1.xpose.msra.mxu0 0.0
        %365 = vmatprep.subr.mxu0 0.0
        %366 = vmatpush1.xpose.msra.mxu0 0.0
        %367 = vmatprep.subr.mxu0 0.0
        %368 = vmatpush1.xpose.msra.mxu0 0.0
        %369 = vmatprep.subr.mxu0 0.0
        %370 = vmatpush1.xpose.msra.mxu0 0.0
        %371 = vmatprep.subr.mxu0 0.0
        %372 = vmatpush1.xpose.msra.mxu0 0.0
        %373 = vmatprep.subr.mxu0 0.0
        %374 = vmatpush1.xpose.msra.mxu0 0.0
        %375 = vmatprep.subr.mxu0 0.0
        %376 = vmatpush1.xpose.msra.mxu0 0.0
        %377 = vmatprep.subr.mxu0 0.0
        %378 = vmatpush1.xpose.msra.mxu0 0.0
        %379 = vmatprep.subr.mxu0 0.0
        %380 = vmatpush1.xpose.msra.mxu0 0.0
        %381 = vmatprep.subr.mxu0 0.0
        %382 = vmatpush1.xpose.msra.mxu0 0.0
        %383 = vmatprep.subr.mxu0 0.0
        %384 = vmatpush1.xpose.msra.mxu0 0.0
        %385 = vmatprep.subr.mxu0 0.0
        %386 = vmatpush1.xpose.msra.mxu0 0.0
        %387 = vmatprep.subr.mxu0 0.0
        %388 = vmatpush1.xpose.msra.mxu0 0.0
        %389 = vmatprep.mubr.f32.mxu0 0.0
        %390 = vmatmul.mubr.f32.gmra.mrb[0].mxu0 %v320
        %v391 = vpop.f32.mrb[0].mxu0
        %v392 = vadd.f32 0.0, %v391
        %v393 = vpop.f32.mrb[0].mxu0
        %394 = vdwg.mxu0
        %v396 = vsel %vm242, %v236, 0
        %v399 = vsel %vm242, %v240, 0
        %401 = vmatprep.subr.mxu0 0.0
        %402 = vmatpush1.xpose.msra.mxu0 %v399
        %403 = vmatprep.subr.mxu0 0.0
        %404 = vmatpush1.xpose.msra.mxu0 0.0
        %405 = vmatprep.subr.mxu0 0.0
        %406 = vmatpush1.xpose.msra.mxu0 0.0
        %407 = vmatprep.subr.mxu0 0.0
        %408 = vmatpush1.xpose.msra.mxu0 0.0
        %409 = vmatprep.subr.mxu0 0.0
        %410 = vmatpush1.xpose.msra.mxu0 0.0
        %411 = vmatprep.subr.mxu0 0.0
        %412 = vmatpush1.xpose.msra.mxu0 0.0
        %413 = vmatprep.subr.mxu0 0.0
        %414 = vmatpush1.xpose.msra.mxu0 0.0
        %415 = vmatprep.subr.mxu0 0.0
        %416 = vmatpush1.xpose.msra.mxu0 0.0
        %417 = vmatprep.subr.mxu0 0.0
        %418 = vmatpush1.xpose.msra.mxu0 0.0
        %419 = vmatprep.subr.mxu0 0.0
        %420 = vmatpush1.xpose.msra.mxu0 0.0
        %421 = vmatprep.subr.mxu0 0.0
        %422 = vmatpush1.xpose.msra.mxu0 0.0
        %423 = vmatprep.subr.mxu0 0.0
        %424 = vmatpush1.xpose.msra.mxu0 0.0
        %425 = vmatprep.subr.mxu0 0.0
        %426 = vmatpush1.xpose.msra.mxu0 0.0
        %427 = vmatprep.subr.mxu0 0.0
        %428 = vmatpush1.xpose.msra.mxu0 0.0
        %429 = vmatprep.subr.mxu0 0.0
        %430 = vmatpush1.xpose.msra.mxu0 0.0
        %431 = vmatprep.subr.mxu0 0.0
        %432 = vmatpush1.xpose.msra.mxu0 0.0
        %433 = vmatprep.subr.mxu0 0.0
        %434 = vmatpush1.xpose.msra.mxu0 0.0
        %435 = vmatprep.subr.mxu0 0.0
        %436 = vmatpush1.xpose.msra.mxu0 0.0
        %437 = vmatprep.subr.mxu0 0.0
        %438 = vmatpush1.xpose.msra.mxu0 0.0
        %439 = vmatprep.subr.mxu0 0.0
        %440 = vmatpush1.xpose.msra.mxu0 0.0
        %441 = vmatprep.subr.mxu0 0.0
        %442 = vmatpush1.xpose.msra.mxu0 0.0
        %443 = vmatprep.subr.mxu0 0.0
        %444 = vmatpush1.xpose.msra.mxu0 0.0
        %445 = vmatprep.subr.mxu0 0.0
        %446 = vmatpush1.xpose.msra.mxu0 0.0
        %447 = vmatprep.subr.mxu0 0.0
        %448 = vmatpush1.xpose.msra.mxu0 0.0
        %449 = vmatprep.subr.mxu0 0.0
        %450 = vmatpush1.xpose.msra.mxu0 0.0
        %451 = vmatprep.subr.mxu0 0.0
        %452 = vmatpush1.xpose.msra.mxu0 0.0
        %453 = vmatprep.subr.mxu0 0.0
        %454 = vmatpush1.xpose.msra.mxu0 0.0
        %455 = vmatprep.subr.mxu0 0.0
        %456 = vmatpush1.xpose.msra.mxu0 0.0
        %457 = vmatprep.subr.mxu0 0.0
        %458 = vmatpush1.xpose.msra.mxu0 0.0
        %459 = vmatprep.subr.mxu0 0.0
        %460 = vmatpush1.xpose.msra.mxu0 0.0
        %461 = vmatprep.subr.mxu0 0.0
        %462 = vmatpush1.xpose.msra.mxu0 0.0
        %463 = vmatprep.subr.mxu0 0.0
        %464 = vmatpush1.xpose.msra.mxu0 0.0
        %465 = vmatprep.mubr.f32.mxu0 0.0
        %466 = vmatmul.mubr.f32.gmra.mrb[0].mxu0 %v396
        %v467 = vpop.f32.mrb[0].mxu0
        %v468 = vadd.f32 0.0, %v467
        %v469 = vpop.f32.mrb[0].mxu0
        %470 = vdwg.mxu0
        %v472 = vsel %vm242, %v237, 0
        %v475 = vsel %vm242, %v241, 0
        %477 = vmatprep.subr.mxu0 0.0
        %478 = vmatpush1.xpose.msra.mxu0 %v475
        %479 = vmatprep.subr.mxu0 0.0
        %480 = vmatpush1.xpose.msra.mxu0 0.0
        %481 = vmatprep.subr.mxu0 0.0
        %482 = vmatpush1.xpose.msra.mxu0 0.0
        %483 = vmatprep.subr.mxu0 0.0
        %484 = vmatpush1.xpose.msra.mxu0 0.0
        %485 = vmatprep.subr.mxu0 0.0
        %486 = vmatpush1.xpose.msra.mxu0 0.0
        %487 = vmatprep.subr.mxu0 0.0
        %488 = vmatpush1.xpose.msra.mxu0 0.0
        %489 = vmatprep.subr.mxu0 0.0
        %490 = vmatpush1.xpose.msra.mxu0 0.0
        %491 = vmatprep.subr.mxu0 0.0
        %492 = vmatpush1.xpose.msra.mxu0 0.0
        %493 = vmatprep.subr.mxu0 0.0
        %494 = vmatpush1.xpose.msra.mxu0 0.0
        %495 = vmatprep.subr.mxu0 0.0
        %496 = vmatpush1.xpose.msra.mxu0 0.0
        %497 = vmatprep.subr.mxu0 0.0
        %498 = vmatpush1.xpose.msra.mxu0 0.0
        %499 = vmatprep.subr.mxu0 0.0
        %500 = vmatpush1.xpose.msra.mxu0 0.0
        %501 = vmatprep.subr.mxu0 0.0
        %502 = vmatpush1.xpose.msra.mxu0 0.0
        %503 = vmatprep.subr.mxu0 0.0
        %504 = vmatpush1.xpose.msra.mxu0 0.0
        %505 = vmatprep.subr.mxu0 0.0
        %506 = vmatpush1.xpose.msra.mxu0 0.0
        %507 = vmatprep.subr.mxu0 0.0
        %508 = vmatpush1.xpose.msra.mxu0 0.0
        %509 = vmatprep.subr.mxu0 0.0
        %510 = vmatpush1.xpose.msra.mxu0 0.0
        %511 = vmatprep.subr.mxu0 0.0
        %512 = vmatpush1.xpose.msra.mxu0 0.0
        %513 = vmatprep.subr.mxu0 0.0
        %514 = vmatpush1.xpose.msra.mxu0 0.0
        %515 = vmatprep.subr.mxu0 0.0
        %516 = vmatpush1.xpose.msra.mxu0 0.0
        %517 = vmatprep.subr.mxu0 0.0
        %518 = vmatpush1.xpose.msra.mxu0 0.0
        %519 = vmatprep.subr.mxu0 0.0
        %520 = vmatpush1.xpose.msra.mxu0 0.0
        %521 = vmatprep.subr.mxu0 0.0
        %522 = vmatpush1.xpose.msra.mxu0 0.0
        %523 = vmatprep.subr.mxu0 0.0
        %524 = vmatpush1.xpose.msra.mxu0 0.0
        %525 = vmatprep.subr.mxu0 0.0
        %526 = vmatpush1.xpose.msra.mxu0 0.0
        %527 = vmatprep.subr.mxu0 0.0
        %528 = vmatpush1.xpose.msra.mxu0 0.0
        %529 = vmatprep.subr.mxu0 0.0
        %530 = vmatpush1.xpose.msra.mxu0 0.0
        %531 = vmatprep.subr.mxu0 0.0
        %532 = vmatpush1.xpose.msra.mxu0 0.0
        %533 = vmatprep.subr.mxu0 0.0
        %534 = vmatpush1.xpose.msra.mxu0 0.0
        %535 = vmatprep.subr.mxu0 0.0
        %536 = vmatpush1.xpose.msra.mxu0 0.0
        %537 = vmatprep.subr.mxu0 0.0
        %538 = vmatpush1.xpose.msra.mxu0 0.0
        %539 = vmatprep.subr.mxu0 0.0
        %540 = vmatpush1.xpose.msra.mxu0 0.0
        %541 = vmatprep.mubr.f32.mxu0 0.0
        %542 = vmatmul.mubr.f32.gmra.mrb[0].mxu0 %v472
        %v543 = vpop.f32.mrb[0].mxu0
        %v544 = vadd.f32 0.0, %v543
        %v545 = vpop.f32.mrb[0].mxu0
        %546 = vdwg.mxu0
        %v547 = vmul.f32 %v316, 0.17677669
        %v548 = vmul.f32 %v392, 0.17677669
        %v549 = vmul.f32 %v468, 0.17677669
        %v550 = vmul.f32 %v544, 0.17677669
        %vm551 = vcmask 64512
        %552 = vst.msk [vmem:[%s230] sm:$0xff] %vm551, %v547
        %553 = vst.msk [vmem:[%s230 + $0x8] sm:$0xff] %vm551, %v548
        %554 = vst.msk [vmem:[%s230 + $0x10] sm:$0xff] %vm551, %v549
        %555 = vst.msk [vmem:[%s230 + $0x18] sm:$0xff] %vm551, %v550
        %s556 = sand.u32 %s109, 1
        %s557 = scalar_lea.sflag [#allocation4], %s556
        %s558 = sand.u32 %s109, 1
        %s559 = smul.addr %s558, 32
        %s560 = scalar_lea.vmem [#allocation7], %s559
        // Predicated region
        $region37: #{tpu_custom_call.1} parent=27 // pred_check
          %p561 = pneg %p119
        $region38: #{tpu_custom_call.1} parent=27 // pred_check_branch
          %563 = sbr.rel (%p561) target = $region40
        $region39: #{tpu_custom_call.1} parent=27 // pred_region
          %s564 = smul.u32 4, %s27
          %s566 = ssub.s32 512, 512
          %567 = vsyncadd %s557, %s566
          %s568 = sadd.s32 %s29, %s28
          %s569 = sadd.s32 %s568, %s564
          %s570 = smul.addr %s569, 128
          %s571 = scalar_lea.hbm %s2, %s570
          %s572 = sshll.u32 %s560, 4
          %s573 = int_to_ptr.vmem [resolvable:$true] %s572
          %578 = dma.vmem_to_hbm [thread:$0]  %s573, 512, %s571, %s557, 128, 128, 8
        $region40: #{tpu_custom_call.1} parent=27 // pred_fallthru
          _
      $region28: #{tpu_custom_call.1} parent=5 // pred_fallthru
        _
      %p579 = scmp.le.s32.totalorder 2, %s17
      // Predicated region
      $region41: #{tpu_custom_call.1} parent=5 // pred_check
        %p580 = pneg %p579
      $region42: #{tpu_custom_call.1} parent=5 // pred_check_branch
        %582 = sbr.rel (%p580) target = $region44
      $region43: #{tpu_custom_call.1} parent=5 // pred_region
        %s583 = ssub.s32 %s17, 2
        // Predicated region
        $region45: #{tpu_custom_call.1} parent=43 // pred_check
          %p584 = pneg %p125
        $region46: #{tpu_custom_call.1} parent=43 // pred_check_branch
          %586 = sbr.rel (%p584) target = $region48
        $region47: #{tpu_custom_call.1} parent=43 // pred_region
          %s587 = sand.u32 %s110, 1
          %s588 = scalar_lea.sflag [#allocation4], %s587
          %s589 = sand.u32 %s110, 1
          %s590 = smul.addr %s589, 32
          %s591 = scalar_lea.vmem [#allocation7], %s590
          %592 = dma.done %s588, 512
        $region48: #{tpu_custom_call.1} parent=43 // pred_fallthru
          _
      $region44: #{tpu_custom_call.1} parent=5 // pred_fallthru
        _
    $region6: #{tpu_custom_call.1} parent=1 // loop_footer
      %s21 = sadd.s32 1, %s17
    $region7: #{tpu_custom_call.1} parent=1 // loop_footer_branch
      %16 = sbr.rel target = $region3
    $region8: #{tpu_custom_call.1} parent=1 // loop_exit
      _
    %593 = vsyncpa [#allocation3], 1
    %s594 = scalar_lea.sflag [#allocation3], 1
    %595 = vsyncpa %s594, 1
    %596 = vsyncpa [#allocation6], 1
    %s597 = scalar_lea.sflag [#allocation6], 1
    %598 = vsyncpa %s597, 1
    %599 = vsyncpa [#allocation4], 1
    %s600 = scalar_lea.sflag [#allocation4], 1
    %601 = vsyncpa %s600, 1

</llo_original>
